<compile_context>
chip_gen: v6e
topology: v6e:2x2x1
jax: 0.10.0
libtpu: 0.0.40
codegen_flags: <defaults>
</compile_context>

<pallas_src>
import functools

import jax
import jax.numpy as jnp
from jax.experimental import pallas as pl
from jax.experimental.pallas import tpu as pltpu


_LANE = 128
_SMALL_N = 4096   # below this, XLA's fused elementwise+reduce beats a kernel launch


def _device_kind() -> str:
    try:
        return jax.devices()[0].device_kind.lower()
    except Exception:
        return ""


def _num_tensorcores() -> int:
    # v7x has 2 TensorCores per chip; v5e / v6e have 1.  On 1-TC chips a core
    # split is just a serial re-loop (duplicate DMA), so keep it v7x-only.
    return 2 if "v7" in _device_kind() else 1


def _pick_block_rows(itemsize: int) -> int:
    # Per-input, per-buffer block bytes.  2 inputs x 2 pipeline buffers must
    # fit the default scoped-VMEM budget with headroom:
    #   v6e / v7x: 32 MiB scoped default -> 4 MiB blocks (16 MiB pipelined).
    #   v5e / unknown: 16 MiB scoped default -> 2 MiB blocks (8 MiB pipelined).
    kind = _device_kind()
    if ("v6" in kind) or ("v7" in kind):
        target_bytes = 4 << 20
    else:
        target_bytes = 2 << 20
    rows = target_bytes // (_LANE * max(1, itemsize))
    return max(8, (rows // 8) * 8)


def _l1_sum_kernel(p_ref, t_ref, o_ref, acc_ref, *, rows, block_rows,
                   blocks_per_core, nblocks, ragged, has_clamped):
    c = pl.program_id(0)   # core-sharded ("parallel") axis
    j = pl.program_id(1)   # sequential reduction ("arbitrary") axis

    # Init the single-vreg accumulator at the start of each core's sub-grid.
    @pl.when(j == 0)
    def _():
        acc_ref[...] = jnp.zeros_like(acc_ref)

    def fold_add(d):
        # (block_rows, 128) -> (block_rows//8, 8, 128); summing the leading
        # axis is pure vreg-wise VALU adds into the (8, 128) accumulator.
        acc_ref[...] += d.reshape(block_rows // 8, 8, d.shape[-1]).sum(axis=0)

    def accumulate():
        p = p_ref[...]
        t = t_ref[...]
        if p.dtype != jnp.float32:
            p = p.astype(jnp.float32)
        if t.dtype != jnp.float32:
            t = t.astype(jnp.float32)
        diff = jnp.abs(p - t)

        if ragged:
            g = c * blocks_per_core + j
            last = nblocks - 1

            @pl.when(g == last)
            def _():
                # Only the last real block can contain garbage rows past `rows`.
                row_ids = jax.lax.broadcasted_iota(jnp.int32, diff.shape, 0)
                valid = (g * block_rows + row_ids) < rows
                fold_add(jnp.where(valid, diff, 0.0))

            @pl.when(g != last)
            def _():
                fold_add(diff)
        else:
            fold_add(diff)

    if has_clamped:
        # Clamped duplicate blocks of the v7x core split: skip entirely.
        g = c * blocks_per_core + j

        @pl.when(g < nblocks)
        def _():
            accumulate()
    else:
        accumulate()

    # One full reduction + scalar store per core, on its last step only.
    @pl.when(j == pl.num_programs(1) - 1)
    def _():
        o_ref[0, 0] = jnp.sum(acc_ref[...])


def l1_loss(predict: jax.Array, target: jax.Array) -> jax.Array:
    """Pallas TPU implementation of F.l1_loss(predict, target) (mean reduction)."""
    assert predict.shape == target.shape, "shapes must match"
    out_dtype = jnp.result_type(predict.dtype, target.dtype)
    n = predict.size
    if n == 0:
        # torch.mean over an empty tensor -> nan
        return jnp.array(jnp.nan, dtype=out_dtype)

    p = predict.reshape(-1)   # flatten of a contiguous array: free
    t = target.reshape(-1)

    # Small-input fast path: launch/DMA setup dominates; let XLA fuse it.
    if n < _SMALL_N:
        return jnp.mean(
            jnp.abs(p.astype(jnp.float32) - t.astype(jnp.float32))
        ).astype(out_dtype)

    rem = n % _LANE
    n_aligned = n - rem
    tail_sum = jnp.float32(0.0)
    if rem:
        # Tiny (<128 element) remainder handled in plain JAX -- no full-array
        # jnp.pad copy of both inputs.
        tail_sum = jnp.sum(
            jnp.abs(p[n_aligned:].astype(jnp.float32)
                    - t[n_aligned:].astype(jnp.float32)))
        p = p[:n_aligned]
        t = t[:n_aligned]

    rows = n_aligned // _LANE
    p2 = p.reshape(rows, _LANE)
    t2 = t.reshape(rows, _LANE)

    itemsize = jnp.dtype(predict.dtype).itemsize
    block_rows = min(_pick_block_rows(itemsize), (rows // 8) * 8)
    nblocks = pl.cdiv(rows, block_rows)
    nc = min(_num_tensorcores(), nblocks)     # never more cores than blocks
    bpc = pl.cdiv(nblocks, nc)                # row-blocks per core

    ragged = (rows % block_rows) != 0         # last block has garbage rows
    has_clamped = (nc * bpc) != nblocks       # core split has duplicate blocks

    def in_map(c, j):
        # Clamp so duplicate blocks of the parallel split never issue an OOB
        # DMA; their accumulation is skipped inside the kernel.
        return (jnp.minimum(c * bpc + j, nblocks - 1), 0)

    kernel = functools.partial(
        _l1_sum_kernel,
        rows=rows,
        block_rows=block_rows,
        blocks_per_core=bpc,
        nblocks=nblocks,
        ragged=ragged,
        has_clamped=has_clamped,
    )

    partials = pl.pallas_call(
        kernel,
        out_shape=jax.ShapeDtypeStruct((nc, 1), jnp.float32),
        grid=(nc, bpc),
        in_specs=[
            pl.BlockSpec((block_rows, _LANE), in_map),
            pl.BlockSpec((block_rows, _LANE), in_map),
        ],
        out_specs=pl.BlockSpec((1, 1), lambda c, j: (c, 0),
                               memory_space=pltpu.SMEM),
        scratch_shapes=[pltpu.VMEM((8, _LANE), jnp.float32)],
        compiler_params=pltpu.CompilerParams(
            dimension_semantics=("parallel", "arbitrary"),
        ),
        cost_estimate=pl.CostEstimate(
            flops=3 * n_aligned,
            transcendentals=0,
            bytes_accessed=2 * n_aligned * itemsize + 8 * nc,
        ),
    )(p2, t2)

    total = partials.sum() + tail_sum
    mean = total / jnp.float32(n)
    # F.l1_loss returns the loss in the (promoted) input dtype.
    return mean.astype(out_dtype)


if __name__ == "__main__":
    print("> [Loss] --- Temporal L1 Loss ---")

    key = jax.random.PRNGKey(0)

    # Small audio-like shapes (batch, channels, time) exercising all paths:
    #  (2, 1, 1000):  tiny, non-lane-aligned     -> plain-JAX fast path
    #  (2, 4, 4096):  lane-aligned, one block    -> kernel, no masking
    #  (2, 2, 50001): non-lane-aligned, 2 blocks -> kernel + JAX tail + ragged mask
    #  (2, 2, 80000): lane-aligned, 2 blocks     -> kernel + ragged mask (+ v7x split)
    shapes = [(2, 1, 1000), (2, 4, 4096), (2, 2, 50001), (2, 2, 80000)]

    for shp in shapes:
        k1, k2, key = jax.random.split(key, 3)
        predict = jax.random.normal(k1, shp, dtype=jnp.float32)
        target = jax.random.normal(k2, shp, dtype=jnp.float32)

        loss = jax.block_until_ready(l1_loss(predict, target))
        ref = jnp.mean(jnp.abs(predict - target))
        assert jnp.allclose(loss, ref, rtol=1e-5, atol=1e-5), (shp, loss, ref)

    print("KERNEL_OK")
</pallas_src>

<mosaic_0001>
module attributes {stable_mosaic.version = 11 : i64} {
  func.func @_l1_sum_kernel(%arg0: i32, %arg1: i32, %arg2: memref<256x128xf32, #tpu.memory_space<vmem>>, %arg3: memref<256x128xf32, #tpu.memory_space<vmem>>, %arg4: memref<1x1xf32, #tpu.memory_space<smem>>, %arg5: memref<8x128xf32, #tpu.memory_space<vmem>>) attributes {dimension_semantics = [#tpu.dimension_semantics<parallel>, #tpu.dimension_semantics<arbitrary>], iteration_bounds = array<i64: 1, 1>, scalar_prefetch = 0 : i64, scratch_operands = 1 : i64, tpu.core_type = #tpu.core_type<tc>, window_params = [{transform_indices = @transform_0, window_bounds = array<i64: 256, 128>}, {transform_indices = @transform_1, window_bounds = array<i64: 256, 128>}, {transform_indices = @transform_2, window_bounds = array<i64: 1, 1>}]} {
    %c0_i32 = arith.constant 0 : i32
    %0 = arith.cmpi eq, %arg1, %c0_i32 : i32
    %1 = arith.extui %0 : i1 to i32
    %c0_i32_0 = arith.constant 0 : i32
    %2 = arith.cmpi ne, %1, %c0_i32_0 : i32
    scf.if %2 {
      %cst_10 = arith.constant 0.000000e+00 : f32
      %15 = vector.broadcast %cst_10 : f32 to vector<8x128xf32>
      %c0_11 = arith.constant 0 : index
      %c0_12 = arith.constant 0 : index
      %16 = vector.load %arg5[%c0_11, %c0_12] : memref<8x128xf32, #tpu.memory_space<vmem>>, vector<8x128xf32>
      tpu.vector_store %arg5[%c0_11, %c0_12], %15 {strides = array<i32>} : memref<8x128xf32, #tpu.memory_space<vmem>>, vector<8x128xf32>,
    } else {
    }
    %c0 = arith.constant 0 : index
    %c0_1 = arith.constant 0 : index
    %3 = vector.load %arg2[%c0, %c0_1] : memref<256x128xf32, #tpu.memory_space<vmem>>, vector<256x128xf32>
    %c0_2 = arith.constant 0 : index
    %c0_3 = arith.constant 0 : index
    %4 = vector.load %arg3[%c0_2, %c0_3] : memref<256x128xf32, #tpu.memory_space<vmem>>, vector<256x128xf32>
    %5 = arith.subf %3, %4 : vector<256x128xf32>
    %6 = math.absf %5 : vector<256x128xf32>
    %c0_4 = arith.constant 0 : index
    %c0_5 = arith.constant 0 : index
    %7 = vector.load %arg5[%c0_4, %c0_5] : memref<8x128xf32, #tpu.memory_space<vmem>>, vector<8x128xf32>
    %8 = vector.shape_cast %6 : vector<256x128xf32> to vector<32x8x128xf32>
    %cst = arith.constant dense<0.000000e+00> : vector<8x128xf32>
    %9 = vector.multi_reduction <add>, %8, %cst [0] : vector<32x8x128xf32> to vector<8x128xf32>
    %10 = arith.addf %7, %9 : vector<8x128xf32>
    %c0_6 = arith.constant 0 : index
    %c0_7 = arith.constant 0 : index
    %11 = vector.load %arg5[%c0_6, %c0_7] : memref<8x128xf32, #tpu.memory_space<vmem>>, vector<8x128xf32>
    tpu.vector_store %arg5[%c0_6, %c0_7], %10 {strides = array<i32>} : memref<8x128xf32, #tpu.memory_space<vmem>>, vector<8x128xf32>,
    %c0_i32_8 = arith.constant 0 : i32
    %12 = arith.cmpi eq, %arg1, %c0_i32_8 : i32
    %13 = arith.extui %12 : i1 to i32
    %c0_i32_9 = arith.constant 0 : i32
    %14 = arith.cmpi ne, %13, %c0_i32_9 : i32
    scf.if %14 {
      %c0_10 = arith.constant 0 : index
      %c0_11 = arith.constant 0 : index
      %15 = vector.load %arg5[%c0_10, %c0_11] : memref<8x128xf32, #tpu.memory_space<vmem>>, vector<8x128xf32>
      %16 = vector.shape_cast %15 : vector<8x128xf32> to vector<1x8x128xf32>
      %cst_12 = arith.constant dense<0.000000e+00> : vector<1xf32>
      %17 = vector.multi_reduction <add>, %16, %cst_12 [1, 2] : vector<1x8x128xf32> to vector<1xf32>
      %18 = vector.shape_cast %17 : vector<1xf32> to vector<1x1x1xf32>
      %19 = vector.extract %18[0, 0, 0] : f32 from vector<1x1x1xf32>
      %c0_13 = arith.constant 0 : index
      %c0_14 = arith.constant 0 : index
      %20 = memref.load %arg4[%c0_13, %c0_14] : memref<1x1xf32, #tpu.memory_space<smem>>
      memref.store %19, %arg4[%c0_13, %c0_14] : memref<1x1xf32, #tpu.memory_space<smem>>
    } else {
    }
    return
  }
  func.func @transform_0(%arg0: i32, %arg1: i32) -> (i32, i32) {
    %c1_i32 = arith.constant 1 : i32
    %0 = arith.muli %arg0, %c1_i32 : i32
    %1 = arith.addi %0, %arg1 : i32
    %c0_i32 = arith.constant 0 : i32
    %2 = arith.minsi %1, %c0_i32 : i32
    %c0_i32_0 = arith.constant 0 : i32
    %c0_i32_1 = arith.constant 0 : i32
    return %2, %c0_i32_0 : i32, i32
  }
  func.func @transform_1(%arg0: i32, %arg1: i32) -> (i32, i32) {
    %c1_i32 = arith.constant 1 : i32
    %0 = arith.muli %arg0, %c1_i32 : i32
    %1 = arith.addi %0, %arg1 : i32
    %c0_i32 = arith.constant 0 : i32
    %2 = arith.minsi %1, %c0_i32 : i32
    %c0_i32_0 = arith.constant 0 : i32
    %c0_i32_1 = arith.constant 0 : i32
    return %2, %c0_i32_0 : i32, i32
  }
  func.func @transform_2(%arg0: i32, %arg1: i32) -> (i32, i32) {
    %c0_i32 = arith.constant 0 : i32
    %c0_i32_0 = arith.constant 0 : i32
    return %arg0, %c0_i32 : i32, i32
  }
}

</mosaic_0001>

<llo_original>
// kernel: tpu_custom_call.1
$region0: #{tpu_custom_call.1}
  #allocation0 [shape = 'u32[]', space=smem, size = 0x4, offset = 0x4, fixed_abs, tag = 'smem constant byte address 0x4 - core index']
  #allocation1 [shape = 'u32[144,128]{1,0:T(1,128)}', space=vmem, size = 0x12000, scoped, tag = 'internal scratch']
  #allocation2 [shape = 'f32[8,128]{1,0:T(8,128)}', space=vmem, size = 0x1000, scoped, tag = 'scratch operand']
  %s0 = inlined_call_operand.hbm [shape: f32[256,128], index: 0, kind: input, shape index: {}]
  %s1 = inlined_call_operand.hbm [shape: f32[256,128], index: 1, kind: input, shape index: {}]
  %s2 = inlined_call_operand.hbm [shape: f32[1,1], index: 2, kind: output, shape index: {}]
  %s3 = sld [smem:[#allocation0]]
  $region34: #{tpu_custom_call.1} parent=0
    _
  %s5 = ssub.s32 1, %s3
  %s6 = scalar_select 0, %s5, %s3
  $region1: #{tpu_custom_call.1} parent=0
    #allocation3 [shape = 'u8[131072]{0}', space=vmem, size = 0x20000, scoped, tag = 'input window, operand 0, single buffered']
    #allocation4 [shape = 's32[1]{0}', space=sflag, size = 0x4, scoped, tag = 'scoped memory for tpu_custom_call.1']
    #allocation5 [shape = 's32[1]{0}', space=sflag, size = 0x4, scoped, tag = 'scoped memory for tpu_custom_call.1']
    #allocation6 [shape = 'u8[131072]{0}', space=vmem, size = 0x20000, scoped, tag = 'input window, operand 1, single buffered']
    #allocation7 [shape = 's32[1]{0}', space=sflag, size = 0x4, scoped, tag = 'scoped memory for tpu_custom_call.1']
    #allocation8 [shape = 'u8[512]{0}', space=smem, size = 0x200, scoped, tag = 'output window, operand 0, single buffered']
    %7 = vsyncpa [#allocation4], 0
    %8 = vsyncpa [#allocation7], 0
    %9 = vsyncpa [#allocation5], 0
    // Predicated region
    $region2: #{tpu_custom_call.1} parent=1 // pred_check
      _
    $region3: #{tpu_custom_call.1} parent=1 // pred_check_branch
      %11 = sbr.rel (0) target = $region5
    $region4: #{tpu_custom_call.1} parent=1 // pred_region
      %s12 = sadd.s32 0, 0
      %p13 = scmp.lt.s32.totalorder %s12, 0
      %s14 = scalar_select %p13, %s12, 0
      %s15 = smul.u32 32, %s14
      %s17 = ssub.s32 4096, 4096
      %18 = vsyncadd [#allocation4], %s17
      %s19 = smul.addr %s15, 128
      %s20 = scalar_lea.hbm %s0, %s19
      %s21 = sshll.u32 [#allocation3], 4
      %s22 = int_to_ptr.vmem [resolvable:$true] %s21
      %27 = dma.hbm_to_vmem [thread:$0]  %s20, 4096, %s22, [#allocation4], 128, 128, 8
    $region5: #{tpu_custom_call.1} parent=1 // pred_fallthru
      _
    // Predicated region
    $region6: #{tpu_custom_call.1} parent=1 // pred_check
      _
    $region7: #{tpu_custom_call.1} parent=1 // pred_check_branch
      %29 = sbr.rel (0) target = $region9
    $region8: #{tpu_custom_call.1} parent=1 // pred_region
      %s30 = sadd.s32 0, 0
      %p31 = scmp.lt.s32.totalorder %s30, 0
      %s32 = scalar_select %p31, %s30, 0
      %s33 = smul.u32 32, %s32
      %s35 = ssub.s32 4096, 4096
      %36 = vsyncadd [#allocation7], %s35
      %s37 = smul.addr %s33, 128
      %s38 = scalar_lea.hbm %s1, %s37
      %s39 = sshll.u32 [#allocation6], 4
      %s40 = int_to_ptr.vmem [resolvable:$true] %s39
      %45 = dma.hbm_to_vmem [thread:$0]  %s38, 4096, %s40, [#allocation7], 128, 128, 8
    $region9: #{tpu_custom_call.1} parent=1 // pred_fallthru
      _
    // Predicated region
    $region10: #{tpu_custom_call.1} parent=1 // pred_check
      _
    $region11: #{tpu_custom_call.1} parent=1 // pred_check_branch
      %47 = sbr.rel (0) target = $region13
    $region12: #{tpu_custom_call.1} parent=1 // pred_region
      %48 = dma.done [#allocation4], 4096
    $region13: #{tpu_custom_call.1} parent=1 // pred_fallthru
      _
    // Predicated region
    $region14: #{tpu_custom_call.1} parent=1 // pred_check
      _
    $region15: #{tpu_custom_call.1} parent=1 // pred_check_branch
      %50 = sbr.rel (0) target = $region17
    $region16: #{tpu_custom_call.1} parent=1 // pred_region
      %51 = dma.done [#allocation7], 4096
    $region17: #{tpu_custom_call.1} parent=1 // pred_fallthru
      _
    %s52 = sadd.s32 0, 0
    %p53 = scmp.lt.s32.totalorder %s52, 0
    %s54 = scalar_select %p53, %s52, 0
    %s55 = smul.u32 32, %s54
    %s56 = sadd.s32 0, 0
    %p57 = scmp.lt.s32.totalorder %s56, 0
    %s58 = scalar_select %p57, %s56, 0
    %s59 = smul.u32 32, %s58
    %p60 = scmp.eq.s32.totalorder 0, 0
    // Predicated region
    $region18: #{tpu_custom_call.1} parent=1 // pred_check
      %p61 = pneg %p60
    $region19: #{tpu_custom_call.1} parent=1 // pred_check_branch
      %63 = sbr.rel (%p61) target = $region21
    $region20: #{tpu_custom_call.1} parent=1 // pred_region
      %64 = vst [vmem:[#allocation2] sm:$0xff] 0.0
    $region21: #{tpu_custom_call.1} parent=1 // pred_fallthru
      _
    %v65 = vld [vmem:[#allocation3] sm:$0xff]
    %v66 = vld [vmem:[#allocation3 + $0x8] sm:$0xff]
    %v67 = vld [vmem:[#allocation3 + $0x10] sm:$0xff]
    %v68 = vld [vmem:[#allocation3 + $0x18] sm:$0xff]
    %v69 = vld [vmem:[#allocation3 + $0x20] sm:$0xff]
    %v70 = vld [vmem:[#allocation3 + $0x28] sm:$0xff]
    %v71 = vld [vmem:[#allocation3 + $0x30] sm:$0xff]
    %v72 = vld [vmem:[#allocation3 + $0x38] sm:$0xff]
    %v73 = vld [vmem:[#allocation3 + $0x40] sm:$0xff]
    %v74 = vld [vmem:[#allocation3 + $0x48] sm:$0xff]
    %v75 = vld [vmem:[#allocation3 + $0x50] sm:$0xff]
    %v76 = vld [vmem:[#allocation3 + $0x58] sm:$0xff]
    %v77 = vld [vmem:[#allocation3 + $0x60] sm:$0xff]
    %v78 = vld [vmem:[#allocation3 + $0x68] sm:$0xff]
    %v79 = vld [vmem:[#allocation3 + $0x70] sm:$0xff]
    %v80 = vld [vmem:[#allocation3 + $0x78] sm:$0xff]
    %v81 = vld [vmem:[#allocation3 + $0x80] sm:$0xff]
    %v82 = vld [vmem:[#allocation3 + $0x88] sm:$0xff]
    %v83 = vld [vmem:[#allocation3 + $0x90] sm:$0xff]
    %v84 = vld [vmem:[#allocation3 + $0x98] sm:$0xff]
    %v85 = vld [vmem:[#allocation3 + $0xa0] sm:$0xff]
    %v86 = vld [vmem:[#allocation3 + $0xa8] sm:$0xff]
    %v87 = vld [vmem:[#allocation3 + $0xb0] sm:$0xff]
    %v88 = vld [vmem:[#allocation3 + $0xb8] sm:$0xff]
    %v89 = vld [vmem:[#allocation3 + $0xc0] sm:$0xff]
    %v90 = vld [vmem:[#allocation3 + $0xc8] sm:$0xff]
    %v91 = vld [vmem:[#allocation3 + $0xd0] sm:$0xff]
    %v92 = vld [vmem:[#allocation3 + $0xd8] sm:$0xff]
    %v93 = vld [vmem:[#allocation3 + $0xe0] sm:$0xff]
    %v94 = vld [vmem:[#allocation3 + $0xe8] sm:$0xff]
    %v95 = vld [vmem:[#allocation3 + $0xf0] sm:$0xff]
    %v96 = vld [vmem:[#allocation3 + $0xf8] sm:$0xff]
    %v97 = vld [vmem:[#allocation6] sm:$0xff]
    %v98 = vld [vmem:[#allocation6 + $0x8] sm:$0xff]
    %v99 = vld [vmem:[#allocation6 + $0x10] sm:$0xff]
    %v100 = vld [vmem:[#allocation6 + $0x18] sm:$0xff]
    %v101 = vld [vmem:[#allocation6 + $0x20] sm:$0xff]
    %v102 = vld [vmem:[#allocation6 + $0x28] sm:$0xff]
    %v103 = vld [vmem:[#allocation6 + $0x30] sm:$0xff]
    %v104 = vld [vmem:[#allocation6 + $0x38] sm:$0xff]
    %v105 = vld [vmem:[#allocation6 + $0x40] sm:$0xff]
    %v106 = vld [vmem:[#allocation6 + $0x48] sm:$0xff]
    %v107 = vld [vmem:[#allocation6 + $0x50] sm:$0xff]
    %v108 = vld [vmem:[#allocation6 + $0x58] sm:$0xff]
    %v109 = vld [vmem:[#allocation6 + $0x60] sm:$0xff]
    %v110 = vld [vmem:[#allocation6 + $0x68] sm:$0xff]
    %v111 = vld [vmem:[#allocation6 + $0x70] sm:$0xff]
    %v112 = vld [vmem:[#allocation6 + $0x78] sm:$0xff]
    %v113 = vld [vmem:[#allocation6 + $0x80] sm:$0xff]
    %v114 = vld [vmem:[#allocation6 + $0x88] sm:$0xff]
    %v115 = vld [vmem:[#allocation6 + $0x90] sm:$0xff]
    %v116 = vld [vmem:[#allocation6 + $0x98] sm:$0xff]
    %v117 = vld [vmem:[#allocation6 + $0xa0] sm:$0xff]
    %v118 = vld [vmem:[#allocation6 + $0xa8] sm:$0xff]
    %v119 = vld [vmem:[#allocation6 + $0xb0] sm:$0xff]
    %v120 = vld [vmem:[#allocation6 + $0xb8] sm:$0xff]
    %v121 = vld [vmem:[#allocation6 + $0xc0] sm:$0xff]
    %v122 = vld [vmem:[#allocation6 + $0xc8] sm:$0xff]
    %v123 = vld [vmem:[#allocation6 + $0xd0] sm:$0xff]
    %v124 = vld [vmem:[#allocation6 + $0xd8] sm:$0xff]
    %v125 = vld [vmem:[#allocation6 + $0xe0] sm:$0xff]
    %v126 = vld [vmem:[#allocation6 + $0xe8] sm:$0xff]
    %v127 = vld [vmem:[#allocation6 + $0xf0] sm:$0xff]
    %v128 = vld [vmem:[#allocation6 + $0xf8] sm:$0xff]
    %v129 = vsub.f32 %v65, %v97
    %v130 = vsub.f32 %v66, %v98
    %v131 = vsub.f32 %v67, %v99
    %v132 = vsub.f32 %v68, %v100
    %v133 = vsub.f32 %v69, %v101
    %v134 = vsub.f32 %v70, %v102
    %v135 = vsub.f32 %v71, %v103
    %v136 = vsub.f32 %v72, %v104
    %v137 = vsub.f32 %v73, %v105
    %v138 = vsub.f32 %v74, %v106
    %v139 = vsub.f32 %v75, %v107
    %v140 = vsub.f32 %v76, %v108
    %v141 = vsub.f32 %v77, %v109
    %v142 = vsub.f32 %v78, %v110
    %v143 = vsub.f32 %v79, %v111
    %v144 = vsub.f32 %v80, %v112
    %v145 = vsub.f32 %v81, %v113
    %v146 = vsub.f32 %v82, %v114
    %v147 = vsub.f32 %v83, %v115
    %v148 = vsub.f32 %v84, %v116
    %v149 = vsub.f32 %v85, %v117
    %v150 = vsub.f32 %v86, %v118
    %v151 = vsub.f32 %v87, %v119
    %v152 = vsub.f32 %v88, %v120
    %v153 = vsub.f32 %v89, %v121
    %v154 = vsub.f32 %v90, %v122
    %v155 = vsub.f32 %v91, %v123
    %v156 = vsub.f32 %v92, %v124
    %v157 = vsub.f32 %v93, %v125
    %v158 = vsub.f32 %v94, %v126
    %v159 = vsub.f32 %v95, %v127
    %v160 = vsub.f32 %v96, %v128
    %v161 = vand.u32 2147483647, %v129
    %v162 = vand.u32 2147483647, %v130
    %v163 = vand.u32 2147483647, %v131
    %v164 = vand.u32 2147483647, %v132
    %v165 = vand.u32 2147483647, %v133
    %v166 = vand.u32 2147483647, %v134
    %v167 = vand.u32 2147483647, %v135
    %v168 = vand.u32 2147483647, %v136
    %v169 = vand.u32 2147483647, %v137
    %v170 = vand.u32 2147483647, %v138
    %v171 = vand.u32 2147483647, %v139
    %v172 = vand.u32 2147483647, %v140
    %v173 = vand.u32 2147483647, %v141
    %v174 = vand.u32 2147483647, %v142
    %v175 = vand.u32 2147483647, %v143
    %v176 = vand.u32 2147483647, %v144
    %v177 = vand.u32 2147483647, %v145
    %v178 = vand.u32 2147483647, %v146
    %v179 = vand.u32 2147483647, %v147
    %v180 = vand.u32 2147483647, %v148
    %v181 = vand.u32 2147483647, %v149
    %v182 = vand.u32 2147483647, %v150
    %v183 = vand.u32 2147483647, %v151
    %v184 = vand.u32 2147483647, %v152
    %v185 = vand.u32 2147483647, %v153
    %v186 = vand.u32 2147483647, %v154
    %v187 = vand.u32 2147483647, %v155
    %v188 = vand.u32 2147483647, %v156
    %v189 = vand.u32 2147483647, %v157
    %v190 = vand.u32 2147483647, %v158
    %v191 = vand.u32 2147483647, %v159
    %v192 = vand.u32 2147483647, %v160
    %v193 = vld [vmem:[#allocation2] sm:$0xff]
    %v194 = vadd.f32 %v161, %v162
    %v195 = vadd.f32 %v194, %v163
    %v196 = vadd.f32 %v195, %v164
    %v197 = vadd.f32 %v196, %v165
    %v198 = vadd.f32 %v197, %v166
    %v199 = vadd.f32 %v198, %v167
    %v200 = vadd.f32 %v199, %v168
    %v201 = vadd.f32 %v200, %v169
    %v202 = vadd.f32 %v201, %v170
    %v203 = vadd.f32 %v202, %v171
    %v204 = vadd.f32 %v203, %v172
    %v205 = vadd.f32 %v204, %v173
    %v206 = vadd.f32 %v205, %v174
    %v207 = vadd.f32 %v206, %v175
    %v208 = vadd.f32 %v207, %v176
    %v209 = vadd.f32 %v208, %v177
    %v210 = vadd.f32 %v209, %v178
    %v211 = vadd.f32 %v210, %v179
    %v212 = vadd.f32 %v211, %v180
    %v213 = vadd.f32 %v212, %v181
    %v214 = vadd.f32 %v213, %v182
    %v215 = vadd.f32 %v214, %v183
    %v216 = vadd.f32 %v215, %v184
    %v217 = vadd.f32 %v216, %v185
    %v218 = vadd.f32 %v217, %v186
    %v219 = vadd.f32 %v218, %v187
    %v220 = vadd.f32 %v219, %v188
    %v221 = vadd.f32 %v220, %v189
    %v222 = vadd.f32 %v221, %v190
    %v223 = vadd.f32 %v222, %v191
    %v224 = vadd.f32 %v223, %v192
    %v225 = vadd.f32 %v193, %v224
    %226 = vst [vmem:[#allocation2] sm:$0xff] %v225
    // Predicated region
    $region22: #{tpu_custom_call.1} parent=1 // pred_check
      %p227 = pneg %p60
    $region23: #{tpu_custom_call.1} parent=1 // pred_check_branch
      %229 = sbr.rel (%p227) target = $region25
    $region24: #{tpu_custom_call.1} parent=1 // pred_region
      %v230 = vld [vmem:[#allocation2] sm:$0xff]
      %231 = vadd.xlane.f32.xlu0 %v230
      %v232 = vpop.xlane.xlu0 %231
      %v233 = vrot.slane %v232, 4
      %v234 = vadd.f32 %v232, %v233
      %v235 = vrot.slane %v234, 2
      %v236 = vadd.f32 %v234, %v235
      %v237 = vrot.slane %v236, 1
      %v238 = vadd.f32 %v236, %v237
      %s239 = vtos %v238
      %s240 = scalar_lea.smem [#allocation8], 0
      %241 = sst [smem:[%s240]] %s239
    $region25: #{tpu_custom_call.1} parent=1 // pred_fallthru
      _
    // Predicated region
    $region26: #{tpu_custom_call.1} parent=1 // pred_check
      _
    $region27: #{tpu_custom_call.1} parent=1 // pred_check_branch
      %243 = sbr.rel (0) target = $region29
    $region28: #{tpu_custom_call.1} parent=1 // pred_region
      %s245 = ssub.s32 16, 16
      %246 = vsyncadd [#allocation5], %s245
      %249 = dma.smem_to_hbm [#allocation8], 16, %s2, [#allocation5]
    $region29: #{tpu_custom_call.1} parent=1 // pred_fallthru
      _
    // Predicated region
    $region30: #{tpu_custom_call.1} parent=1 // pred_check
      _
    $region31: #{tpu_custom_call.1} parent=1 // pred_check_branch
      %251 = sbr.rel (0) target = $region33
    $region32: #{tpu_custom_call.1} parent=1 // pred_region
      %252 = dma.done [#allocation5], 16
    $region33: #{tpu_custom_call.1} parent=1 // pred_fallthru
      _
    %253 = sfence
    %254 = vsyncpa [#allocation4], 1
    %255 = vsyncpa [#allocation7], 1
    %256 = vsyncpa [#allocation5], 1

</llo_original>
